<compile_context>
chip_gen: v5e
topology: v5e:2x2
jax: 0.10.0
libtpu: 0.0.40
codegen_flags: <defaults>
</compile_context>

<pallas_src>
import functools

import jax
import jax.numpy as jnp
from jax.experimental import pallas as pl
from jax.experimental.pallas import tpu as pltpu

_NEG_BIG = -1e30  # pins padded logit columns; avoids -inf NaN pitfalls


def _round_up(x, m):
    return ((x + m - 1) // m) * m


def _actor_categorical_kernel(x_ref, g_ref, w1_ref, b1_ref, w2_ref, b2_ref,
                              logits_ref, logprobs_ref, actions_ref):
    # ---- actor_net forward (MLP): bf16 MXU matmuls, f32 accumulation ----
    h = jnp.dot(x_ref[...], w1_ref[...],
                preferred_element_type=jnp.float32) + b1_ref[...]
    h = jnp.maximum(h, 0.0)                                        # ReLU (f32)
    logits = jnp.dot(h.astype(jnp.bfloat16), w2_ref[...],
                     preferred_element_type=jnp.float32) + b2_ref[...]
    logits_ref[...] = logits                                       # [TB, A_pad]

    # ---- Categorical(logits): normalized log-probs (stable logsumexp) ----
    m = jnp.max(logits, axis=-1, keepdims=True)
    lse = m + jnp.log(jnp.sum(jnp.exp(logits - m), axis=-1, keepdims=True))
    logprobs_ref[...] = logits - lse

    # ---- pi.sample() via Gumbel-max (noise streamed in per tile) ----
    z = logits + g_ref[...]
    zmax = jnp.max(z, axis=-1, keepdims=True)
    idx = jax.lax.broadcasted_iota(jnp.int32, z.shape, dimension=1)
    picked = jnp.where(z == zmax, idx, jnp.int32(z.shape[-1]))
    actions_ref[...] = jnp.min(picked, axis=-1, keepdims=True)     # [TB, 1]


@functools.partial(jax.jit, static_argnames=("block_b",))
def actor_categorical_forward(states, w1, b1, w2, b2, key, *, block_b=256):
    """Pallas analogue of ActorCategorical.forward:
    returns ((logits, log_probs), actions) for pi = Categorical(logits=logits),
    actions = pi.sample()."""
    B, obs_dim = states.shape
    hidden, n_actions = w2.shape

    a_pad = _round_up(n_actions, 128)          # lane-dense logits / log_probs
    tb = min(block_b, _round_up(B, 8))         # batch tile (sublane multiple)
    b_pad = _round_up(B, tb)
    grid = (pl.cdiv(b_pad, tb),)

    # Pad & cast operands: bf16 on the MXU, f32 biases; padded logit columns
    # are pinned to a very negative bias so they never win logsumexp / argmax.
    x = jnp.zeros((b_pad, obs_dim), jnp.bfloat16).at[:B].set(
        states.astype(jnp.bfloat16))
    w1b = w1.astype(jnp.bfloat16)
    w2b = jnp.zeros((hidden, a_pad), jnp.bfloat16).at[:, :n_actions].set(
        w2.astype(jnp.bfloat16))
    b1f = b1.reshape(1, hidden).astype(jnp.float32)
    b2f = jnp.full((1, a_pad), _NEG_BIG, jnp.float32).at[:, :n_actions].set(
        b2.reshape(1, n_actions).astype(jnp.float32))
    gumbel = jax.random.gumbel(key, (b_pad, a_pad), jnp.float32)

    logits, log_probs, actions = pl.pallas_call(
        _actor_categorical_kernel,
        out_shape=(
            jax.ShapeDtypeStruct((b_pad, a_pad), jnp.float32),
            jax.ShapeDtypeStruct((b_pad, a_pad), jnp.float32),
            jax.ShapeDtypeStruct((b_pad, 1), jnp.int32),
        ),
        grid=grid,
        in_specs=[
            pl.BlockSpec((tb, obs_dim), lambda i: (i, 0)),      # states tile
            pl.BlockSpec((tb, a_pad), lambda i: (i, 0)),        # gumbel tile
            pl.BlockSpec((obs_dim, hidden), lambda i: (0, 0)),  # W1 resident
            pl.BlockSpec((1, hidden), lambda i: (0, 0)),        # b1 resident
            pl.BlockSpec((hidden, a_pad), lambda i: (0, 0)),    # W2 resident
            pl.BlockSpec((1, a_pad), lambda i: (0, 0)),         # b2 resident
        ],
        out_specs=(
            pl.BlockSpec((tb, a_pad), lambda i: (i, 0)),
            pl.BlockSpec((tb, a_pad), lambda i: (i, 0)),
            pl.BlockSpec((tb, 1), lambda i: (i, 0)),
        ),
        compiler_params=pltpu.CompilerParams(
            dimension_semantics=("parallel",)),
    )(x, gumbel, w1b, b1f, w2b, b2f)

    return ((logits[:B, :n_actions], log_probs[:B, :n_actions]),
            actions[:B, 0])


def init_actor_net_params(key, obs_dim, hidden, n_actions):
    """Deterministic synthetic parameters for the 2-layer MLP actor_net."""
    k1, k2, k3, k4 = jax.random.split(key, 4)
    w1 = jax.random.normal(k1, (obs_dim, hidden), jnp.float32) * (1.0 / jnp.sqrt(obs_dim))
    b1 = jax.random.normal(k2, (1, hidden), jnp.float32) * 0.01
    w2 = jax.random.normal(k3, (hidden, n_actions), jnp.float32) * (1.0 / jnp.sqrt(hidden))
    b2 = jax.random.normal(k4, (1, n_actions), jnp.float32) * 0.01
    return w1, b1, w2, b2


if __name__ == "__main__":
    B, OBS, HID, ACT = 8, 32, 128, 8

    key = jax.random.PRNGKey(0)
    k_params, k_states, k_sample = jax.random.split(key, 3)
    w1, b1, w2, b2 = init_actor_net_params(k_params, OBS, HID, ACT)
    states = jax.random.normal(k_states, (B, OBS), jnp.float32)

    (logits, log_probs), actions = actor_categorical_forward(
        states, w1, b1, w2, b2, k_sample)
    jax.block_until_ready((logits, log_probs, actions))

    # sanity 1: logits match the f32 reference forward (bf16 MXU tolerance)
    h_ref = jnp.maximum(states @ w1 + b1, 0.0)
    logits_ref = h_ref @ w2 + b2
    max_err = float(jnp.max(jnp.abs(logits - logits_ref)))
    assert max_err < 0.15, max_err

    # sanity 2: log_probs rows normalize to 1, actions are valid indices
    probs_sum = jnp.sum(jnp.exp(log_probs), axis=-1)
    assert jnp.allclose(probs_sum, 1.0, atol=1e-4), probs_sum
    assert actions.shape == (B,) and actions.dtype == jnp.int32
    assert bool(jnp.all((actions >= 0) & (actions < ACT)))

    print("KERNEL_OK")
</pallas_src>

<mosaic_0001>
module attributes {stable_mosaic.version = 11 : i64} {
  func.func @_actor_categorical_kernel(%arg0: i32, %arg1: memref<8x32xbf16, #tpu.memory_space<vmem>>, %arg2: memref<8x128xf32, #tpu.memory_space<vmem>>, %arg3: memref<32x128xbf16, #tpu.memory_space<vmem>>, %arg4: memref<1x128xf32, #tpu.memory_space<vmem>>, %arg5: memref<128x128xbf16, #tpu.memory_space<vmem>>, %arg6: memref<1x128xf32, #tpu.memory_space<vmem>>, %arg7: memref<8x128xf32, #tpu.memory_space<vmem>>, %arg8: memref<8x128xf32, #tpu.memory_space<vmem>>, %arg9: memref<8x1xi32, #tpu.memory_space<vmem>>) attributes {dimension_semantics = [#tpu.dimension_semantics<parallel>], iteration_bounds = array<i64: 1>, scalar_prefetch = 0 : i64, scratch_operands = 0 : i64, tpu.core_type = #tpu.core_type<tc>, window_params = [{transform_indices = @transform_0, window_bounds = array<i64: 8, 32>}, {transform_indices = @transform_1, window_bounds = array<i64: 8, 128>}, {pipeline_mode = #tpu.pipeline_mode<synchronous>, transform_indices = @transform_2, window_bounds = array<i64: 32, 128>}, {pipeline_mode = #tpu.pipeline_mode<synchronous>, transform_indices = @transform_3, window_bounds = array<i64: 1, 128>}, {pipeline_mode = #tpu.pipeline_mode<synchronous>, transform_indices = @transform_4, window_bounds = array<i64: 128, 128>}, {pipeline_mode = #tpu.pipeline_mode<synchronous>, transform_indices = @transform_5, window_bounds = array<i64: 1, 128>}, {transform_indices = @transform_6, window_bounds = array<i64: 8, 128>}, {transform_indices = @transform_7, window_bounds = array<i64: 8, 128>}, {transform_indices = @transform_8, window_bounds = array<i64: 8, 1>}]} {
    %c0 = arith.constant 0 : index
    %c0_0 = arith.constant 0 : index
    %0 = vector.load %arg1[%c0, %c0_0] : memref<8x32xbf16, #tpu.memory_space<vmem>>, vector<8x32xbf16>
    %c0_1 = arith.constant 0 : index
    %c0_2 = arith.constant 0 : index
    %1 = vector.load %arg3[%c0_1, %c0_2] : memref<32x128xbf16, #tpu.memory_space<vmem>>, vector<32x128xbf16>
    %cst = arith.constant dense<0.000000e+00> : vector<8x128xf32>
    %2 = tpu.matmul %0, %1, %cst {dimension_numbers = #tpu.dot_dimension_numbers<[1], [0], [0], [1], [0, 0, 1, 1], [], []>} : vector<8x32xbf16>, vector<32x128xbf16>, vector<8x128xf32> -> vector<8x128xf32>
    %c0_3 = arith.constant 0 : index
    %c0_4 = arith.constant 0 : index
    %3 = vector.load %arg4[%c0_3, %c0_4] : memref<1x128xf32, #tpu.memory_space<vmem>>, vector<1x128xf32>
    %4 = vector.broadcast %3 : vector<1x128xf32> to vector<8x128xf32>
    %5 = arith.addf %2, %4 : vector<8x128xf32>
    %cst_5 = arith.constant 0.000000e+00 : f32
    %6 = vector.broadcast %cst_5 : f32 to vector<8x128xf32>
    %7 = arith.maximumf %5, %6 : vector<8x128xf32>
    %8 = arith.truncf %7 : vector<8x128xf32> to vector<8x128xbf16>
    %c0_6 = arith.constant 0 : index
    %c0_7 = arith.constant 0 : index
    %9 = vector.load %arg5[%c0_6, %c0_7] : memref<128x128xbf16, #tpu.memory_space<vmem>>, vector<128x128xbf16>
    %cst_8 = arith.constant dense<0.000000e+00> : vector<8x128xf32>
    %10 = tpu.matmul %8, %9, %cst_8 {dimension_numbers = #tpu.dot_dimension_numbers<[1], [0], [0], [1], [0, 0, 1, 1], [], []>} : vector<8x128xbf16>, vector<128x128xbf16>, vector<8x128xf32> -> vector<8x128xf32>
    %c0_9 = arith.constant 0 : index
    %c0_10 = arith.constant 0 : index
    %11 = vector.load %arg6[%c0_9, %c0_10] : memref<1x128xf32, #tpu.memory_space<vmem>>, vector<1x128xf32>
    %12 = vector.broadcast %11 : vector<1x128xf32> to vector<8x128xf32>
    %13 = arith.addf %10, %12 : vector<8x128xf32>
    %c0_11 = arith.constant 0 : index
    %c0_12 = arith.constant 0 : index
    %14 = vector.load %arg7[%c0_11, %c0_12] : memref<8x128xf32, #tpu.memory_space<vmem>>, vector<8x128xf32>
    tpu.vector_store %arg7[%c0_11, %c0_12], %13 {strides = array<i32>} : memref<8x128xf32, #tpu.memory_space<vmem>>, vector<8x128xf32>,
    %cst_13 = arith.constant dense<0xFF800000> : vector<8xf32>
    %15 = vector.multi_reduction <maximumf>, %13, %cst_13 [1] : vector<8x128xf32> to vector<8xf32>
    %16 = vector.shape_cast %15 : vector<8xf32> to vector<8x1xf32>
    %17 = vector.broadcast %16 : vector<8x1xf32> to vector<8x128xf32>
    %18 = arith.subf %13, %17 : vector<8x128xf32>
    %19 = math.exp %18 : vector<8x128xf32>
    %cst_14 = arith.constant dense<0.000000e+00> : vector<8xf32>
    %20 = vector.multi_reduction <add>, %19, %cst_14 [1] : vector<8x128xf32> to vector<8xf32>
    %21 = vector.shape_cast %20 : vector<8xf32> to vector<8x1xf32>
    %22 = math.log %21 : vector<8x1xf32>
    %23 = arith.addf %16, %22 : vector<8x1xf32>
    %24 = vector.broadcast %23 : vector<8x1xf32> to vector<8x128xf32>
    %25 = arith.subf %13, %24 : vector<8x128xf32>
    %c0_15 = arith.constant 0 : index
    %c0_16 = arith.constant 0 : index
    %26 = vector.load %arg8[%c0_15, %c0_16] : memref<8x128xf32, #tpu.memory_space<vmem>>, vector<8x128xf32>
    tpu.vector_store %arg8[%c0_15, %c0_16], %25 {strides = array<i32>} : memref<8x128xf32, #tpu.memory_space<vmem>>, vector<8x128xf32>,
    %c0_17 = arith.constant 0 : index
    %c0_18 = arith.constant 0 : index
    %27 = vector.load %arg2[%c0_17, %c0_18] : memref<8x128xf32, #tpu.memory_space<vmem>>, vector<8x128xf32>
    %28 = arith.addf %13, %27 : vector<8x128xf32>
    %cst_19 = arith.constant dense<0xFF800000> : vector<8xf32>
    %29 = vector.multi_reduction <maximumf>, %28, %cst_19 [1] : vector<8x128xf32> to vector<8xf32>
    %30 = vector.shape_cast %29 : vector<8xf32> to vector<8x1xf32>
    %31 = tpu.iota {dimensions = array<i32: 1>} : vector<8x128xi32>
    %32 = vector.broadcast %30 : vector<8x1xf32> to vector<8x128xf32>
    %33 = arith.cmpf oeq, %28, %32 : vector<8x128xf32>
    %c128_i32 = arith.constant 128 : i32
    %34 = vector.broadcast %c128_i32 : i32 to vector<8x128xi32>
    %35 = arith.select %33, %31, %34 : vector<8x128xi1>, vector<8x128xi32>
    %cst_20 = arith.constant dense<2147483647> : vector<8xi32>
    %36 = vector.multi_reduction <minsi>, %35, %cst_20 [1] : vector<8x128xi32> to vector<8xi32>
    %37 = vector.shape_cast %36 : vector<8xi32> to vector<8x1xi32>
    %c0_21 = arith.constant 0 : index
    %c0_22 = arith.constant 0 : index
    %38 = vector.load %arg9[%c0_21, %c0_22] : memref<8x1xi32, #tpu.memory_space<vmem>>, vector<8x1xi32>
    tpu.vector_store %arg9[%c0_21, %c0_22], %37 {strides = array<i32>} : memref<8x1xi32, #tpu.memory_space<vmem>>, vector<8x1xi32>,
    return
  }
  func.func @transform_0(%arg0: i32) -> (i32, i32) {
    %c0_i32 = arith.constant 0 : i32
    %c0_i32_0 = arith.constant 0 : i32
    return %arg0, %c0_i32 : i32, i32
  }
  func.func @transform_1(%arg0: i32) -> (i32, i32) {
    %c0_i32 = arith.constant 0 : i32
    %c0_i32_0 = arith.constant 0 : i32
    return %arg0, %c0_i32 : i32, i32
  }
  func.func @transform_2(%arg0: i32) -> (i32, i32) {
    %c0_i32 = arith.constant 0 : i32
    %c0_i32_0 = arith.constant 0 : i32
    %c0_i32_1 = arith.constant 0 : i32
    return %c0_i32, %c0_i32_0 : i32, i32
  }
  func.func @transform_3(%arg0: i32) -> (i32, i32) {
    %c0_i32 = arith.constant 0 : i32
    %c0_i32_0 = arith.constant 0 : i32
    %c0_i32_1 = arith.constant 0 : i32
    return %c0_i32, %c0_i32_0 : i32, i32
  }
  func.func @transform_4(%arg0: i32) -> (i32, i32) {
    %c0_i32 = arith.constant 0 : i32
    %c0_i32_0 = arith.constant 0 : i32
    %c0_i32_1 = arith.constant 0 : i32
    return %c0_i32, %c0_i32_0 : i32, i32
  }
  func.func @transform_5(%arg0: i32) -> (i32, i32) {
    %c0_i32 = arith.constant 0 : i32
    %c0_i32_0 = arith.constant 0 : i32
    %c0_i32_1 = arith.constant 0 : i32
    return %c0_i32, %c0_i32_0 : i32, i32
  }
  func.func @transform_6(%arg0: i32) -> (i32, i32) {
    %c0_i32 = arith.constant 0 : i32
    %c0_i32_0 = arith.constant 0 : i32
    return %arg0, %c0_i32 : i32, i32
  }
  func.func @transform_7(%arg0: i32) -> (i32, i32) {
    %c0_i32 = arith.constant 0 : i32
    %c0_i32_0 = arith.constant 0 : i32
    return %arg0, %c0_i32 : i32, i32
  }
  func.func @transform_8(%arg0: i32) -> (i32, i32) {
    %c0_i32 = arith.constant 0 : i32
    %c0_i32_0 = arith.constant 0 : i32
    return %arg0, %c0_i32 : i32, i32
  }
}

</mosaic_0001>

<llo_original>
// kernel: actor_categorical_forward.1
$region0: #{actor_categorical_forward.1}
  #allocation0 [shape = 'u32[]', space=smem, size = 0x4, offset = 0x4, fixed_abs, tag = 'smem constant byte address 0x4 - core index']
  #allocation1 [shape = 'u32[72,128]{1,0:T(1,128)}', space=vmem, size = 0x9000, scoped, tag = 'internal scratch']
  %s0 = inlined_call_operand.vmem [shape: bf16[8,32], index: 0, kind: input, shape index: {}]
  %s1 = inlined_call_operand.vmem [shape: f32[8,128], index: 1, kind: input, shape index: {}]
  %s2 = inlined_call_operand.vmem [shape: bf16[32,128], index: 2, kind: input, shape index: {}]
  %s3 = inlined_call_operand.vmem [shape: f32[1,128], index: 3, kind: input, shape index: {}]
  %s4 = inlined_call_operand.vmem [shape: bf16[128,128], index: 4, kind: input, shape index: {}]
  %s5 = inlined_call_operand.vmem [shape: f32[1,128], index: 5, kind: input, shape index: {}]
  %s6 = inlined_call_operand.hbm [shape: f32[8,128], index: 6, kind: output, shape index: {0}]
  %s7 = inlined_call_operand.hbm [shape: f32[8,128], index: 7, kind: output, shape index: {1}]
  %s8 = inlined_call_operand.vmem [shape: s32[8,1], index: 8, kind: output, shape index: {2}]
  %9 = xla_tuple %s6, %s7, %s8
  %s10 = sld [smem:[#allocation0]]
  $region50: #{actor_categorical_forward.1} parent=0
    _
  %s12 = ssub.s32 1, %s10
  %s13 = scalar_select 0, %s12, %s10
  $region1: #{actor_categorical_forward.1} parent=0
    #allocation2 [shape = 'u8[4096]{0}', space=vmem, size = 0x1000, scoped, tag = 'output window, operand 0, single buffered']
    #allocation3 [shape = 's32[1]{0}', space=sflag, size = 0x4, scoped, tag = 'scoped memory for actor_categorical_forward.1']
    #allocation4 [shape = 'u8[4096]{0}', space=vmem, size = 0x1000, scoped, tag = 'output window, operand 1, single buffered']
    #allocation5 [shape = 's32[1]{0}', space=sflag, size = 0x4, scoped, tag = 'scoped memory for actor_categorical_forward.1']
    %14 = vsyncpa [#allocation3], 0
    %15 = vsyncpa [#allocation5], 0
    // Predicated region
    $region2: #{actor_categorical_forward.1} parent=1 // pred_check
      _
    $region3: #{actor_categorical_forward.1} parent=1 // pred_check_branch
      %17 = sbr.rel (0) target = $region5
    $region4: #{actor_categorical_forward.1} parent=1 // pred_region
      _
    $region5: #{actor_categorical_forward.1} parent=1 // pred_fallthru
      _
    // Predicated region
    $region6: #{actor_categorical_forward.1} parent=1 // pred_check
      _
    $region7: #{actor_categorical_forward.1} parent=1 // pred_check_branch
      %19 = sbr.rel (0) target = $region9
    $region8: #{actor_categorical_forward.1} parent=1 // pred_region
      _
    $region9: #{actor_categorical_forward.1} parent=1 // pred_fallthru
      _
    // Predicated region
    $region10: #{actor_categorical_forward.1} parent=1 // pred_check
      _
    $region11: #{actor_categorical_forward.1} parent=1 // pred_check_branch
      %21 = sbr.rel (0) target = $region13
    $region12: #{actor_categorical_forward.1} parent=1 // pred_region
      _
    $region13: #{actor_categorical_forward.1} parent=1 // pred_fallthru
      _
    // Predicated region
    $region14: #{actor_categorical_forward.1} parent=1 // pred_check
      _
    $region15: #{actor_categorical_forward.1} parent=1 // pred_check_branch
      %23 = sbr.rel (0) target = $region17
    $region16: #{actor_categorical_forward.1} parent=1 // pred_region
      _
    $region17: #{actor_categorical_forward.1} parent=1 // pred_fallthru
      _
    // Predicated region
    $region18: #{actor_categorical_forward.1} parent=1 // pred_check
      _
    $region19: #{actor_categorical_forward.1} parent=1 // pred_check_branch
      %25 = sbr.rel (0) target = $region21
    $region20: #{actor_categorical_forward.1} parent=1 // pred_region
      _
    $region21: #{actor_categorical_forward.1} parent=1 // pred_fallthru
      _
    // Predicated region
    $region22: #{actor_categorical_forward.1} parent=1 // pred_check
      _
    $region23: #{actor_categorical_forward.1} parent=1 // pred_check_branch
      %27 = sbr.rel (0) target = $region25
    $region24: #{actor_categorical_forward.1} parent=1 // pred_region
      _
    $region25: #{actor_categorical_forward.1} parent=1 // pred_fallthru
      _
    %v29 = vld [vmem:[%s0] sm:$0xf]
    %v30 = vld [vmem:[%s2] sm:$0xf]
    %v31 = vld [vmem:[%s2 + $0x4] sm:$0xf]
    %v32 = vld [vmem:[%s2 + $0x8] sm:$0xf]
    %v33 = vld [vmem:[%s2 + $0xc] sm:$0xf]
    %v34 = vld [vmem:[%s3] sm:$0x1]
    %v36 = vperm.slane %v34, 0
    %v42 = vunpack.c.l.b16 %v30
    %v43 = vunpack.c.l.b16 %v31
    %v44 = vunpack.c.l.b16 %v32
    %v45 = vunpack.c.l.b16 %v33
    %v46 = vpack.c.b16 %v43, %v42
    %v47 = vpack.c.b16 %v45, %v44
    %vm50 = vcmask 261120
    %v52 = vsel %vm50, %v29, 0
    %54 = vmatpush.bf16.msra.mxu0 0
    %55 = vmatpush.bf16.msra.mxu0 0
    %56 = vmatpush.bf16.msra.mxu0 0
    %57 = vmatpush.bf16.msra.mxu0 0
    %58 = vmatpush.bf16.msra.mxu0 0
    %59 = vmatpush.bf16.msra.mxu0 0
    %60 = vmatpush.bf16.msra.mxu0 %v47
    %61 = vmatpush.bf16.msra.mxu0 %v46
    %62 = vmatmul.bf16.gmra.mxu0 %v52
    %v63 = vpop.f32.mrf.mxu0
    %v64 = vadd.f32 %v36, %v63
    %v65 = vpop.f32.mrf.mxu0
    %66 = vdwg.mxu0
    %v67 = vmax.f32 %v64, 0.0
    %v68 = vpack.c.bf16 %v67, %v67
    %v69 = vld [vmem:[%s4] sm:$0xf]
    %v70 = vld [vmem:[%s4 + $0x4] sm:$0xf]
    %v71 = vld [vmem:[%s4 + $0x8] sm:$0xf]
    %v72 = vld [vmem:[%s4 + $0xc] sm:$0xf]
    %v73 = vld [vmem:[%s4 + $0x10] sm:$0xf]
    %v74 = vld [vmem:[%s4 + $0x14] sm:$0xf]
    %v75 = vld [vmem:[%s4 + $0x18] sm:$0xf]
    %v76 = vld [vmem:[%s4 + $0x1c] sm:$0xf]
    %v77 = vld [vmem:[%s4 + $0x20] sm:$0xf]
    %v78 = vld [vmem:[%s4 + $0x24] sm:$0xf]
    %v79 = vld [vmem:[%s4 + $0x28] sm:$0xf]
    %v80 = vld [vmem:[%s4 + $0x2c] sm:$0xf]
    %v81 = vld [vmem:[%s4 + $0x30] sm:$0xf]
    %v82 = vld [vmem:[%s4 + $0x34] sm:$0xf]
    %v83 = vld [vmem:[%s4 + $0x38] sm:$0xf]
    %v84 = vld [vmem:[%s4 + $0x3c] sm:$0xf]
    %v85 = vld [vmem:[%s5] sm:$0x1]
    %v87 = vperm.slane %v85, 0
    %v105 = vunpack.c.l.b16 %v69
    %v106 = vunpack.c.l.b16 %v70
    %v107 = vunpack.c.l.b16 %v71
    %v108 = vunpack.c.l.b16 %v72
    %v109 = vunpack.c.l.b16 %v73
    %v110 = vunpack.c.l.b16 %v74
    %v111 = vunpack.c.l.b16 %v75
    %v112 = vunpack.c.l.b16 %v76
    %v113 = vunpack.c.l.b16 %v77
    %v114 = vunpack.c.l.b16 %v78
    %v115 = vunpack.c.l.b16 %v79
    %v116 = vunpack.c.l.b16 %v80
    %v117 = vunpack.c.l.b16 %v81
    %v118 = vunpack.c.l.b16 %v82
    %v119 = vunpack.c.l.b16 %v83
    %v120 = vunpack.c.l.b16 %v84
    %v121 = vpack.c.b16 %v106, %v105
    %v122 = vpack.c.b16 %v108, %v107
    %v123 = vpack.c.b16 %v110, %v109
    %v124 = vpack.c.b16 %v112, %v111
    %v125 = vpack.c.b16 %v114, %v113
    %v126 = vpack.c.b16 %v116, %v115
    %v127 = vpack.c.b16 %v118, %v117
    %v128 = vpack.c.b16 %v120, %v119
    %137 = vmatpush.bf16.msra.mxu0 %v128
    %138 = vmatpush.bf16.msra.mxu0 %v127
    %139 = vmatpush.bf16.msra.mxu0 %v126
    %140 = vmatpush.bf16.msra.mxu0 %v125
    %141 = vmatpush.bf16.msra.mxu0 %v124
    %142 = vmatpush.bf16.msra.mxu0 %v123
    %143 = vmatpush.bf16.msra.mxu0 %v122
    %144 = vmatpush.bf16.msra.mxu0 %v121
    %145 = vmatmul.bf16.gmra.mxu0 %v68
    %v146 = vpop.f32.mrf.mxu0
    %v147 = vadd.f32 %v87, %v146
    %v148 = vpop.f32.mrf.mxu0
    %149 = vdwg.mxu0
    %150 = vst [vmem:[#allocation2] sm:$0xff] %v147
    %151 = vmax.xlane.f32.xlu0 %v147
    %v152 = vpop.xlane.xlu0 %151
    %v153 = vsub.f32 %v147, %v152
    %v154 = vmul.f32 %v153, 1.442695
    %v155 = vpow.pop %v154
    %156 = vadd.xlane.f32.xlu0 %v155
    %v157 = vpop.xlane.xlu0 %156
    %v158 = vlog2.pop %v157
    %v159 = vmul.f32 %v158, 0.6931472
    %v160 = vadd.f32 %v152, %v159
    %v161 = vsub.f32 %v147, %v160
    %162 = vst [vmem:[#allocation4] sm:$0xff] %v161
    %v163 = vld [vmem:[%s1] sm:$0xff]
    %v164 = vadd.f32 %v147, %v163
    %165 = vmax.xlane.f32.xlu0 %v164
    %v166 = vpop.xlane.xlu0 %165
    %v167 = vlaneseq
    %v168 = vand.u32 %v167, 127
    %vm169 = vcmp.eq.f32.partialorder %v164, %v166
    %v170 = vsel %vm169, %v168, 128
    %v171 = vand.u32 %v170, 65535
    %v172 = vshra.s32 %v170, 16
    %v173 = vcvt.s32.f32 %v171
    %v174 = vcvt.s32.f32 %v172
    %175 = vmin.xlane.f32.xlu0 %v174
    %v176 = vpop.xlane.xlu0 %175
    %vm177 = vcmp.eq.f32.partialorder %v174, %v176
    %v178 = vsel %vm177, %v173, inf
    %179 = vmin.xlane.f32.xlu0 %v178
    %v180 = vpop.xlane.xlu0 %179
    %v181 = vcvt.f32.s32 %v180
    %v182 = vcvt.f32.s32 %v176
    %v183 = vshll.u32 %v182, 16
    %v184 = vadd.s32 %v183, %v181
    %vm185 = vcmask 7168
    %186 = vst.msk [vmem:[%s8] sm:$0xff] %vm185, %v184
    // Predicated region
    $region26: #{actor_categorical_forward.1} parent=1 // pred_check
      _
    $region27: #{actor_categorical_forward.1} parent=1 // pred_check_branch
      %188 = sbr.rel (0) target = $region29
    $region28: #{actor_categorical_forward.1} parent=1 // pred_region
      %190 = vsyncadd [#allocation3], 0
      %s192 = sshll.u32 [#allocation2], 4
      %s193 = int_to_ptr.vmem [resolvable:$true] %s192
      %s194 = sshll.u32 %s6, 4
      %s195 = int_to_ptr.hbm [resolvable:$true] %s194
      %197 = dma.vmem_to_hbm [thread:$0]  %s193, 128, %s195, [#allocation3]
    $region29: #{actor_categorical_forward.1} parent=1 // pred_fallthru
      _
    // Predicated region
    $region30: #{actor_categorical_forward.1} parent=1 // pred_check
      _
    $region31: #{actor_categorical_forward.1} parent=1 // pred_check_branch
      %199 = sbr.rel (0) target = $region33
    $region32: #{actor_categorical_forward.1} parent=1 // pred_region
      %201 = vsyncadd [#allocation5], 0
      %s203 = sshll.u32 [#allocation4], 4
      %s204 = int_to_ptr.vmem [resolvable:$true] %s203
      %s205 = sshll.u32 %s7, 4
      %s206 = int_to_ptr.hbm [resolvable:$true] %s205
      %208 = dma.vmem_to_hbm [thread:$0]  %s204, 128, %s206, [#allocation5]
    $region33: #{actor_categorical_forward.1} parent=1 // pred_fallthru
      _
    // Predicated region
    $region34: #{actor_categorical_forward.1} parent=1 // pred_check
      _
    $region35: #{actor_categorical_forward.1} parent=1 // pred_check_branch
      %210 = sbr.rel (0) target = $region37
    $region36: #{actor_categorical_forward.1} parent=1 // pred_region
      _
    $region37: #{actor_categorical_forward.1} parent=1 // pred_fallthru
      _
    // Predicated region
    $region38: #{actor_categorical_forward.1} parent=1 // pred_check
      _
    $region39: #{actor_categorical_forward.1} parent=1 // pred_check_branch
      %212 = sbr.rel (0) target = $region41
    $region40: #{actor_categorical_forward.1} parent=1 // pred_region
      %214 = dma.done [#allocation3], 128
    $region41: #{actor_categorical_forward.1} parent=1 // pred_fallthru
      _
    // Predicated region
    $region42: #{actor_categorical_forward.1} parent=1 // pred_check
      _
    $region43: #{actor_categorical_forward.1} parent=1 // pred_check_branch
      %216 = sbr.rel (0) target = $region45
    $region44: #{actor_categorical_forward.1} parent=1 // pred_region
      %218 = dma.done [#allocation5], 128
    $region45: #{actor_categorical_forward.1} parent=1 // pred_fallthru
      _
    // Predicated region
    $region46: #{actor_categorical_forward.1} parent=1 // pred_check
      _
    $region47: #{actor_categorical_forward.1} parent=1 // pred_check_branch
      %220 = sbr.rel (0) target = $region49
    $region48: #{actor_categorical_forward.1} parent=1 // pred_region
      _
    $region49: #{actor_categorical_forward.1} parent=1 // pred_fallthru
      _
    %221 = vsyncpa [#allocation3], 1
    %222 = vsyncpa [#allocation5], 1

</llo_original>
